<compile_context>
chip_gen: v5e
topology: v5e:2x2
jax: 0.10.0
libtpu: 0.0.40
codegen_flags: <defaults>
</compile_context>

<pallas_src>
import jax
import jax.numpy as jnp
from jax.experimental import pallas as pl
from jax.experimental.pallas import tpu as pltpu

LANE = 128      # vreg lane width
SUBLANE = 8     # f32 sublane count


def _round_up(x, m):
    return ((x + m - 1) // m) * m


def mlp_kernel(x_ref, *refs):
    """Fused MLP: (Linear -> ReLU)* -> Linear, all layers resident in VMEM.

    refs = (w0, b0, w1, b1, ..., wk, bk, out_ref)
    Matmuls run in the operands' native dtype on the MXU with f32 accumulation
    (preferred_element_type); bias add + ReLU run on the f32 accumulator on the
    VPU. On the bf16 path the activation is cast back to bf16 before the next
    matmul so every hidden-layer matmul stays a single bf16 MXU pass.
    """
    out_ref = refs[-1]
    wb = refs[:-1]
    n_layers = len(wb) // 2

    h = x_ref[...]
    for i in range(n_layers):
        w = wb[2 * i][...]
        b = wb[2 * i + 1][...]
        acc = jnp.dot(h, w, preferred_element_type=jnp.float32)
        acc = acc + b.astype(jnp.float32)              # f32 VPU epilogue
        if i < n_layers - 1:                           # no activation on output layer
            acc = jnp.maximum(acc, 0.0)
            nxt_dtype = wb[2 * (i + 1)].dtype
            # bf16 path: re-cast so the next matmul is bf16 x bf16 (single MXU
            # pass). f32 path: keep f32 (exact, no downcast).
            h = acc.astype(nxt_dtype) if nxt_dtype != jnp.float32 else acc
        else:
            h = acc
    out_ref[...] = h.astype(out_ref.dtype)


def prepare_actor_params(params):
    """Lane-pad weights/biases ONCE (call at init, not inside the hot forward).

    params = [w0, b0, ..., wk, bk] with w: [d_in, d_out], b: [1, d_out].
    Returns (padded_params, dims, dims_padded).
    """
    dims = [params[0].shape[0]] + [w.shape[1] for w in params[0::2]]
    dims_p = [_round_up(d, LANE) for d in dims]
    padded = []
    for i, (w, b) in enumerate(zip(params[0::2], params[1::2])):
        d_in_p, d_out_p = dims_p[i], dims_p[i + 1]
        w_p = jnp.pad(w, ((0, d_in_p - w.shape[0]), (0, d_out_p - w.shape[1])))
        b_p = jnp.pad(b, ((0, 0), (0, d_out_p - b.shape[1])))
        padded += [w_p, b_p]
    return padded, tuple(dims), tuple(dims_p)


def actor_forward(x, padded_params, dims, dims_p, *, max_tile_b=512):
    """Run the Actor policy MLP on x: [B, D_in] -> [B, out_dim].

    padded_params/dims/dims_p come from prepare_actor_params (cached at init).
    Works for f32 or bf16 x/params (bf16 is fed natively to the MXU).
    """
    B, D_in = x.shape
    assert D_in == dims[0]
    out_dim, out_p = dims[-1], dims_p[-1]
    itemsize = jnp.dtype(x.dtype).itemsize

    # Lane-pad x features only when D_in is not already a multiple of 128.
    if dims_p[0] != D_in:
        x = jnp.pad(x, ((0, 0), (0, dims_p[0] - D_in)))

    # ---- batch tile selection --------------------------------------------
    # Tiny B: one block -> zero pipeline overhead (optimal on 1-TC v5e/v6e).
    # B >= 64: at least 2 grid points so v7x's two TensorCores both get work.
    if B < 64:
        tile_b = _round_up(max(B, 1), SUBLANE)
    elif B <= max_tile_b:
        tile_b = _round_up(pl.cdiv(B, 2), SUBLANE)
    else:
        tile_b = max_tile_b

    # ---- VMEM budget (v7x: 64 MiB physical / 32 MiB default scoped) -------
    wb_bytes = sum(int(p.size) * jnp.dtype(p.dtype).itemsize
                   for p in padded_params)             # Buffered(1): one copy each

    def vmem_bytes(tb):
        io = 2 * tb * dims_p[0] * itemsize + 2 * tb * out_p * itemsize  # dbl-buf x/out
        f32_tmp = 2 * tb * max(dims_p) * 4                              # f32 intermediates
        return io + wb_bytes + f32_tmp

    try:
        vmem_cap = int(pltpu.get_tpu_info().vmem_capacity_bytes)
    except Exception:
        vmem_cap = 64 << 20                             # v7x worst case
    budget_cap = (vmem_cap * 3) // 4
    while tile_b > SUBLANE and vmem_bytes(tile_b) > budget_cap:
        tile_b = _round_up(tile_b // 2, SUBLANE)
    vmem_limit = int(min(max(vmem_bytes(tile_b) + (4 << 20), 32 << 20), budget_cap))
    # TODO(synk): if sum(W_p + b_p) ever exceeds the VMEM budget on its own,
    # add a K/N tiling grid axis with an f32 accumulator scratch instead of
    # keeping all layers resident.

    grid = (pl.cdiv(B, tile_b),)

    # Grid-invariant weights/biases: full-shape blocks, single-buffered.
    def const_spec(shape):
        return pl.BlockSpec(shape, lambda i: (0, 0), pipeline_mode=pl.Buffered(1))

    in_specs = [pl.BlockSpec((tile_b, dims_p[0]), lambda i: (i, 0))]
    for p in padded_params:
        in_specs.append(const_spec(p.shape))

    # NOTE: the batch axis is NOT padded to a multiple of tile_b. The last
    # (partial) block reads unspecified rows and its out-of-bounds rows are
    # never written back; this is only valid because each output row depends
    # solely on its own input row (no batch-wise reductions in this kernel).
    out = pl.pallas_call(
        mlp_kernel,
        out_shape=jax.ShapeDtypeStruct((B, out_p), x.dtype),
        grid=grid,
        in_specs=in_specs,
        out_specs=pl.BlockSpec((tile_b, out_p), lambda i: (i, 0)),
        compiler_params=pltpu.CompilerParams(
            dimension_semantics=("parallel",),
            vmem_limit_bytes=vmem_limit),
    )(x, *padded_params)

    # Output is written as a lane-dense 128-wide slab (unmasked vst); slice the
    # real logits back out. TODO(synk): for very large B with tiny out_dim,
    # fold batch rows into lanes instead to cut HBM write traffic.
    return out[:, :out_dim]


def init_mlp_params(key, input_dim, hidden_dim, output_dim, hidden_depth):
    """Deterministic init matching build_mlp's layer shapes (PyTorch Linear init)."""
    dims = [input_dim] + [hidden_dim] * hidden_depth + [output_dim]
    params = []
    for d_in, d_out in zip(dims[:-1], dims[1:]):
        key, kw, kb = jax.random.split(key, 3)
        scale = 1.0 / jnp.sqrt(jnp.float32(d_in))
        w = jax.random.uniform(kw, (d_in, d_out), jnp.float32, -scale, scale)
        b = jax.random.uniform(kb, (1, d_out), jnp.float32, -scale, scale)
        params += [w, b]
    return params


def reference_forward(x, params):
    h = x
    n_layers = len(params) // 2
    for i in range(n_layers):
        h = h @ params[2 * i] + params[2 * i + 1]
        if i < n_layers - 1:
            h = jnp.maximum(h, 0.0)
    return h


if __name__ == "__main__":
    # Small config consistent with the module's forward:
    #   network_output_dim=32, cfg = {hidden_dim: 32, hidden_depth: 2, output_dim: 8}
    batch = 2
    network_output_dim = 32
    hidden_dim = 32
    hidden_depth = 2
    output_dim = 8

    key = jax.random.PRNGKey(0)
    key, kx = jax.random.split(key)
    x = jax.random.normal(kx, (batch, network_output_dim), jnp.float32)
    params = init_mlp_params(key, network_output_dim, hidden_dim,
                             output_dim, hidden_depth)

    # Pad / cache params once, outside the hot forward path.
    pparams, dims, dims_p = prepare_actor_params(params)

    # f32 path: exact match against the pure-JAX reference (no in-kernel downcast).
    out = actor_forward(x, pparams, dims, dims_p)
    out = jax.block_until_ready(out)
    ref = reference_forward(x, params)
    assert out.shape == (batch, output_dim)
    assert jnp.allclose(out, ref, atol=1e-5, rtol=1e-5)

    # bf16 path: params/activations in bf16, fed natively to the MXU with f32
    # accumulation; activations re-cast to bf16 between layers (single-pass MXU).
    x_bf16 = x.astype(jnp.bfloat16)
    params_bf16 = [p.astype(jnp.bfloat16) for p in params]
    pparams_bf16, dims_b, dims_pb = prepare_actor_params(params_bf16)
    out_bf16 = jax.block_until_ready(
        actor_forward(x_bf16, pparams_bf16, dims_b, dims_pb))
    assert out_bf16.shape == (batch, output_dim)
    assert jnp.allclose(out_bf16.astype(jnp.float32), ref, atol=1e-1, rtol=1e-1)

    print("KERNEL_OK")
</pallas_src>

<mosaic_0001>
module attributes {stable_mosaic.version = 11 : i64} {
  func.func @mlp_kernel(%arg0: i32, %arg1: memref<8x128xf32, #tpu.memory_space<vmem>>, %arg2: memref<128x128xf32, #tpu.memory_space<vmem>>, %arg3: memref<1x128xf32, #tpu.memory_space<vmem>>, %arg4: memref<128x128xf32, #tpu.memory_space<vmem>>, %arg5: memref<1x128xf32, #tpu.memory_space<vmem>>, %arg6: memref<128x128xf32, #tpu.memory_space<vmem>>, %arg7: memref<1x128xf32, #tpu.memory_space<vmem>>, %arg8: memref<8x128xf32, #tpu.memory_space<vmem>>) attributes {dimension_semantics = [#tpu.dimension_semantics<parallel>], iteration_bounds = array<i64: 1>, scalar_prefetch = 0 : i64, scratch_operands = 0 : i64, tpu.core_type = #tpu.core_type<tc>, window_params = [{transform_indices = @transform_0, window_bounds = array<i64: 8, 128>}, {pipeline_mode = #tpu.pipeline_mode<synchronous>, transform_indices = @transform_1, window_bounds = array<i64: 128, 128>}, {pipeline_mode = #tpu.pipeline_mode<synchronous>, transform_indices = @transform_2, window_bounds = array<i64: 1, 128>}, {pipeline_mode = #tpu.pipeline_mode<synchronous>, transform_indices = @transform_3, window_bounds = array<i64: 128, 128>}, {pipeline_mode = #tpu.pipeline_mode<synchronous>, transform_indices = @transform_4, window_bounds = array<i64: 1, 128>}, {pipeline_mode = #tpu.pipeline_mode<synchronous>, transform_indices = @transform_5, window_bounds = array<i64: 128, 128>}, {pipeline_mode = #tpu.pipeline_mode<synchronous>, transform_indices = @transform_6, window_bounds = array<i64: 1, 128>}, {transform_indices = @transform_7, window_bounds = array<i64: 8, 128>}]} {
    %c0 = arith.constant 0 : index
    %c0_0 = arith.constant 0 : index
    %0 = vector.load %arg1[%c0, %c0_0] : memref<8x128xf32, #tpu.memory_space<vmem>>, vector<8x128xf32>
    %c0_1 = arith.constant 0 : index
    %c0_2 = arith.constant 0 : index
    %1 = vector.load %arg2[%c0_1, %c0_2] : memref<128x128xf32, #tpu.memory_space<vmem>>, vector<128x128xf32>
    %c0_3 = arith.constant 0 : index
    %c0_4 = arith.constant 0 : index
    %2 = vector.load %arg3[%c0_3, %c0_4] : memref<1x128xf32, #tpu.memory_space<vmem>>, vector<1x128xf32>
    %cst = arith.constant dense<0.000000e+00> : vector<8x128xf32>
    %3 = tpu.matmul %0, %1, %cst {dimension_numbers = #tpu.dot_dimension_numbers<[1], [0], [0], [1], [0, 0, 1, 1], [], []>} : vector<8x128xf32>, vector<128x128xf32>, vector<8x128xf32> -> vector<8x128xf32>
    %4 = vector.broadcast %2 : vector<1x128xf32> to vector<8x128xf32>
    %5 = arith.addf %3, %4 : vector<8x128xf32>
    %cst_5 = arith.constant 0.000000e+00 : f32
    %6 = vector.broadcast %cst_5 : f32 to vector<8x128xf32>
    %7 = arith.maximumf %5, %6 : vector<8x128xf32>
    %c0_6 = arith.constant 0 : index
    %c0_7 = arith.constant 0 : index
    %8 = vector.load %arg4[%c0_6, %c0_7] : memref<128x128xf32, #tpu.memory_space<vmem>>, vector<128x128xf32>
    %c0_8 = arith.constant 0 : index
    %c0_9 = arith.constant 0 : index
    %9 = vector.load %arg5[%c0_8, %c0_9] : memref<1x128xf32, #tpu.memory_space<vmem>>, vector<1x128xf32>
    %cst_10 = arith.constant dense<0.000000e+00> : vector<8x128xf32>
    %10 = tpu.matmul %7, %8, %cst_10 {dimension_numbers = #tpu.dot_dimension_numbers<[1], [0], [0], [1], [0, 0, 1, 1], [], []>} : vector<8x128xf32>, vector<128x128xf32>, vector<8x128xf32> -> vector<8x128xf32>
    %11 = vector.broadcast %9 : vector<1x128xf32> to vector<8x128xf32>
    %12 = arith.addf %10, %11 : vector<8x128xf32>
    %cst_11 = arith.constant 0.000000e+00 : f32
    %13 = vector.broadcast %cst_11 : f32 to vector<8x128xf32>
    %14 = arith.maximumf %12, %13 : vector<8x128xf32>
    %c0_12 = arith.constant 0 : index
    %c0_13 = arith.constant 0 : index
    %15 = vector.load %arg6[%c0_12, %c0_13] : memref<128x128xf32, #tpu.memory_space<vmem>>, vector<128x128xf32>
    %c0_14 = arith.constant 0 : index
    %c0_15 = arith.constant 0 : index
    %16 = vector.load %arg7[%c0_14, %c0_15] : memref<1x128xf32, #tpu.memory_space<vmem>>, vector<1x128xf32>
    %cst_16 = arith.constant dense<0.000000e+00> : vector<8x128xf32>
    %17 = tpu.matmul %14, %15, %cst_16 {dimension_numbers = #tpu.dot_dimension_numbers<[1], [0], [0], [1], [0, 0, 1, 1], [], []>} : vector<8x128xf32>, vector<128x128xf32>, vector<8x128xf32> -> vector<8x128xf32>
    %18 = vector.broadcast %16 : vector<1x128xf32> to vector<8x128xf32>
    %19 = arith.addf %17, %18 : vector<8x128xf32>
    %c0_17 = arith.constant 0 : index
    %c0_18 = arith.constant 0 : index
    %20 = vector.load %arg8[%c0_17, %c0_18] : memref<8x128xf32, #tpu.memory_space<vmem>>, vector<8x128xf32>
    tpu.vector_store %arg8[%c0_17, %c0_18], %19 {strides = array<i32>} : memref<8x128xf32, #tpu.memory_space<vmem>>, vector<8x128xf32>,
    return
  }
  func.func @transform_0(%arg0: i32) -> (i32, i32) {
    %c0_i32 = arith.constant 0 : i32
    %c0_i32_0 = arith.constant 0 : i32
    return %arg0, %c0_i32 : i32, i32
  }
  func.func @transform_1(%arg0: i32) -> (i32, i32) {
    %c0_i32 = arith.constant 0 : i32
    %c0_i32_0 = arith.constant 0 : i32
    %c0_i32_1 = arith.constant 0 : i32
    return %c0_i32, %c0_i32_0 : i32, i32
  }
  func.func @transform_2(%arg0: i32) -> (i32, i32) {
    %c0_i32 = arith.constant 0 : i32
    %c0_i32_0 = arith.constant 0 : i32
    %c0_i32_1 = arith.constant 0 : i32
    return %c0_i32, %c0_i32_0 : i32, i32
  }
  func.func @transform_3(%arg0: i32) -> (i32, i32) {
    %c0_i32 = arith.constant 0 : i32
    %c0_i32_0 = arith.constant 0 : i32
    %c0_i32_1 = arith.constant 0 : i32
    return %c0_i32, %c0_i32_0 : i32, i32
  }
  func.func @transform_4(%arg0: i32) -> (i32, i32) {
    %c0_i32 = arith.constant 0 : i32
    %c0_i32_0 = arith.constant 0 : i32
    %c0_i32_1 = arith.constant 0 : i32
    return %c0_i32, %c0_i32_0 : i32, i32
  }
  func.func @transform_5(%arg0: i32) -> (i32, i32) {
    %c0_i32 = arith.constant 0 : i32
    %c0_i32_0 = arith.constant 0 : i32
    %c0_i32_1 = arith.constant 0 : i32
    return %c0_i32, %c0_i32_0 : i32, i32
  }
  func.func @transform_6(%arg0: i32) -> (i32, i32) {
    %c0_i32 = arith.constant 0 : i32
    %c0_i32_0 = arith.constant 0 : i32
    %c0_i32_1 = arith.constant 0 : i32
    return %c0_i32, %c0_i32_0 : i32, i32
  }
  func.func @transform_7(%arg0: i32) -> (i32, i32) {
    %c0_i32 = arith.constant 0 : i32
    %c0_i32_0 = arith.constant 0 : i32
    return %arg0, %c0_i32 : i32, i32
  }
}

</mosaic_0001>

<llo_original>
// kernel: tpu_custom_call.1
$region0: #{tpu_custom_call.1}
  #allocation0 [shape = 'u32[]', space=smem, size = 0x4, offset = 0x4, fixed_abs, tag = 'smem constant byte address 0x4 - core index']
  #allocation1 [shape = 'u32[72,128]{1,0:T(1,128)}', space=vmem, size = 0x9000, scoped, tag = 'internal scratch']
  %s0 = inlined_call_operand.hbm [shape: f32[2,128], index: 0, kind: input, shape index: {}]
  %s1 = inlined_call_operand.hbm [shape: f32[128,128], index: 1, kind: input, shape index: {}]
  %s2 = inlined_call_operand.vmem [shape: f32[1,128], index: 2, kind: input, shape index: {}]
  %s3 = inlined_call_operand.hbm [shape: f32[128,128], index: 3, kind: input, shape index: {}]
  %s4 = inlined_call_operand.vmem [shape: f32[1,128], index: 4, kind: input, shape index: {}]
  %s5 = inlined_call_operand.hbm [shape: f32[128,128], index: 5, kind: input, shape index: {}]
  %s6 = inlined_call_operand.vmem [shape: f32[1,128], index: 6, kind: input, shape index: {}]
  %s7 = inlined_call_operand.hbm [shape: f32[2,128], index: 7, kind: output, shape index: {}]
  %s8 = sld [smem:[#allocation0]]
  $region54: #{tpu_custom_call.1} parent=0
    _
  %s10 = ssub.s32 1, %s8
  %s11 = scalar_select 0, %s10, %s8
  $region1: #{tpu_custom_call.1} parent=0
    #allocation2 [shape = 'u8[4096]{0}', space=vmem, size = 0x1000, scoped, tag = 'input window, operand 0, single buffered']
    #allocation3 [shape = 's32[1]{0}', space=sflag, size = 0x4, scoped, tag = 'scoped memory for tpu_custom_call.1']
    #allocation4 [shape = 's32[1]{0}', space=sflag, size = 0x4, scoped, tag = 'scoped memory for tpu_custom_call.1']
    #allocation5 [shape = 'u8[65536]{0}', space=vmem, size = 0x10000, scoped, tag = 'input window, operand 1, single buffered']
    #allocation6 [shape = 's32[1]{0}', space=sflag, size = 0x4, scoped, tag = 'scoped memory for tpu_custom_call.1']
    #allocation7 [shape = 'u8[65536]{0}', space=vmem, size = 0x10000, scoped, tag = 'input window, operand 3, single buffered']
    #allocation8 [shape = 'u8[65536]{0}', space=vmem, size = 0x10000, scoped, tag = 'input window, operand 5, single buffered']
    #allocation9 [shape = 's32[1]{0}', space=sflag, size = 0x4, scoped, tag = 'scoped memory for tpu_custom_call.1']
    #allocation10 [shape = 'u8[4096]{0}', space=vmem, size = 0x1000, scoped, tag = 'output window, operand 0, single buffered']
    %12 = vsyncpa [#allocation3], 0
    %13 = vsyncpa [#allocation6], 0
    %14 = vsyncpa [#allocation9], 0
    %15 = vsyncpa [#allocation4], 0
    // Predicated region
    $region2: #{tpu_custom_call.1} parent=1 // pred_check
      _
    $region3: #{tpu_custom_call.1} parent=1 // pred_check_branch
      %17 = sbr.rel (0) target = $region5
    $region4: #{tpu_custom_call.1} parent=1 // pred_region
      %19 = vsyncadd [#allocation3], 96
      %s20 = sshll.u32 %s0, 4
      %s21 = int_to_ptr.hbm [resolvable:$true] %s20
      %s22 = sshll.u32 [#allocation2], 4
      %s23 = int_to_ptr.vmem [resolvable:$true] %s22
      %28 = dma.hbm_to_vmem [thread:$0]  %s21, 32, %s23, [#allocation3], 32, 32, 2
    $region5: #{tpu_custom_call.1} parent=1 // pred_fallthru
      _
    // Predicated region
    $region6: #{tpu_custom_call.1} parent=1 // pred_check
      _
    $region7: #{tpu_custom_call.1} parent=1 // pred_check_branch
      %30 = sbr.rel (0) target = $region9
    $region8: #{tpu_custom_call.1} parent=1 // pred_region
      %32 = vsyncadd [#allocation6], 0
      %s33 = sshll.u32 %s1, 4
      %s34 = int_to_ptr.hbm [resolvable:$true] %s33
      %s35 = sshll.u32 [#allocation5], 4
      %s36 = int_to_ptr.vmem [resolvable:$true] %s35
      %41 = dma.hbm_to_vmem [thread:$0]  %s34, 2048, %s36, [#allocation6], 128, 128, 8
    $region9: #{tpu_custom_call.1} parent=1 // pred_fallthru
      _
    // Predicated region
    $region10: #{tpu_custom_call.1} parent=1 // pred_check
      _
    $region11: #{tpu_custom_call.1} parent=1 // pred_check_branch
      %43 = sbr.rel (0) target = $region13
    $region12: #{tpu_custom_call.1} parent=1 // pred_region
      _
    $region13: #{tpu_custom_call.1} parent=1 // pred_fallthru
      _
    // Predicated region
    $region14: #{tpu_custom_call.1} parent=1 // pred_check
      _
    $region15: #{tpu_custom_call.1} parent=1 // pred_check_branch
      %45 = sbr.rel (0) target = $region17
    $region16: #{tpu_custom_call.1} parent=1 // pred_region
      %47 = vsyncadd [#allocation6], 0
      %s48 = sshll.u32 %s3, 4
      %s49 = int_to_ptr.hbm [resolvable:$true] %s48
      %s50 = sshll.u32 [#allocation7], 4
      %s51 = int_to_ptr.vmem [resolvable:$true] %s50
      %56 = dma.hbm_to_vmem [thread:$0]  %s49, 2048, %s51, [#allocation6], 128, 128, 8
    $region17: #{tpu_custom_call.1} parent=1 // pred_fallthru
      _
    // Predicated region
    $region18: #{tpu_custom_call.1} parent=1 // pred_check
      _
    $region19: #{tpu_custom_call.1} parent=1 // pred_check_branch
      %58 = sbr.rel (0) target = $region21
    $region20: #{tpu_custom_call.1} parent=1 // pred_region
      _
    $region21: #{tpu_custom_call.1} parent=1 // pred_fallthru
      _
    // Predicated region
    $region22: #{tpu_custom_call.1} parent=1 // pred_check
      _
    $region23: #{tpu_custom_call.1} parent=1 // pred_check_branch
      %60 = sbr.rel (0) target = $region25
    $region24: #{tpu_custom_call.1} parent=1 // pred_region
      %62 = vsyncadd [#allocation9], 0
      %s63 = sshll.u32 %s5, 4
      %s64 = int_to_ptr.hbm [resolvable:$true] %s63
      %s65 = sshll.u32 [#allocation8], 4
      %s66 = int_to_ptr.vmem [resolvable:$true] %s65
      %71 = dma.hbm_to_vmem [thread:$0]  %s64, 2048, %s66, [#allocation9], 128, 128, 8
    $region25: #{tpu_custom_call.1} parent=1 // pred_fallthru
      _
    // Predicated region
    $region26: #{tpu_custom_call.1} parent=1 // pred_check
      _
    $region27: #{tpu_custom_call.1} parent=1 // pred_check_branch
      %73 = sbr.rel (0) target = $region29
    $region28: #{tpu_custom_call.1} parent=1 // pred_region
      _
    $region29: #{tpu_custom_call.1} parent=1 // pred_fallthru
      _
    // Predicated region
    $region30: #{tpu_custom_call.1} parent=1 // pred_check
      _
    $region31: #{tpu_custom_call.1} parent=1 // pred_check_branch
      %75 = sbr.rel (0) target = $region33
    $region32: #{tpu_custom_call.1} parent=1 // pred_region
      %77 = dma.done [#allocation3], 128
    $region33: #{tpu_custom_call.1} parent=1 // pred_fallthru
      _
    // Predicated region
    $region34: #{tpu_custom_call.1} parent=1 // pred_check
      _
    $region35: #{tpu_custom_call.1} parent=1 // pred_check_branch
      %79 = sbr.rel (0) target = $region37
    $region36: #{tpu_custom_call.1} parent=1 // pred_region
      %81 = dma.done [#allocation6], 2048
    $region37: #{tpu_custom_call.1} parent=1 // pred_fallthru
      _
    // Predicated region
    $region38: #{tpu_custom_call.1} parent=1 // pred_check
      _
    $region39: #{tpu_custom_call.1} parent=1 // pred_check_branch
      %83 = sbr.rel (0) target = $region41
    $region40: #{tpu_custom_call.1} parent=1 // pred_region
      %85 = dma.done [#allocation6], 2048
    $region41: #{tpu_custom_call.1} parent=1 // pred_fallthru
      _
    // Predicated region
    $region42: #{tpu_custom_call.1} parent=1 // pred_check
      _
    $region43: #{tpu_custom_call.1} parent=1 // pred_check_branch
      %87 = sbr.rel (0) target = $region45
    $region44: #{tpu_custom_call.1} parent=1 // pred_region
      %89 = dma.done [#allocation9], 2048
    $region45: #{tpu_custom_call.1} parent=1 // pred_fallthru
      _
    %v90 = vld [vmem:[#allocation2] sm:$0xff]
    %v91 = vld [vmem:[#allocation5] sm:$0xff]
    %v92 = vld [vmem:[#allocation5 + $0x8] sm:$0xff]
    %v93 = vld [vmem:[#allocation5 + $0x10] sm:$0xff]
    %v94 = vld [vmem:[#allocation5 + $0x18] sm:$0xff]
    %v95 = vld [vmem:[#allocation5 + $0x20] sm:$0xff]
    %v96 = vld [vmem:[#allocation5 + $0x28] sm:$0xff]
    %v97 = vld [vmem:[#allocation5 + $0x30] sm:$0xff]
    %v98 = vld [vmem:[#allocation5 + $0x38] sm:$0xff]
    %v99 = vld [vmem:[#allocation5 + $0x40] sm:$0xff]
    %v100 = vld [vmem:[#allocation5 + $0x48] sm:$0xff]
    %v101 = vld [vmem:[#allocation5 + $0x50] sm:$0xff]
    %v102 = vld [vmem:[#allocation5 + $0x58] sm:$0xff]
    %v103 = vld [vmem:[#allocation5 + $0x60] sm:$0xff]
    %v104 = vld [vmem:[#allocation5 + $0x68] sm:$0xff]
    %v105 = vld [vmem:[#allocation5 + $0x70] sm:$0xff]
    %v106 = vld [vmem:[#allocation5 + $0x78] sm:$0xff]
    %v107 = vld [vmem:[%s2] sm:$0x1]
    %v109 = vperm.slane %v107, 0
    %111 = vmatpush.msra.mxu0 %v106
    %112 = vmatpush.msra.mxu0 %v105
    %113 = vmatpush.msra.mxu0 %v104
    %114 = vmatpush.msra.mxu0 %v103
    %115 = vmatpush.msra.mxu0 %v102
    %116 = vmatpush.msra.mxu0 %v101
    %117 = vmatpush.msra.mxu0 %v100
    %118 = vmatpush.msra.mxu0 %v99
    %119 = vmatpush.msra.mxu0 %v98
    %120 = vmatpush.msra.mxu0 %v97
    %121 = vmatpush.msra.mxu0 %v96
    %122 = vmatpush.msra.mxu0 %v95
    %123 = vmatpush.msra.mxu0 %v94
    %124 = vmatpush.msra.mxu0 %v93
    %125 = vmatpush.msra.mxu0 %v92
    %126 = vmatpush.msra.mxu0 %v91
    %127 = vmatmul.f32.gmra.mxu0 %v90
    %v128 = vpop.f32.mrf.mxu0
    %v129 = vadd.f32 %v109, %v128
    %130 = vdwg.mxu0
    %v131 = vmax.f32 %v129, 0.0
    %v132 = vld [vmem:[#allocation7] sm:$0xff]
    %v133 = vld [vmem:[#allocation7 + $0x8] sm:$0xff]
    %v134 = vld [vmem:[#allocation7 + $0x10] sm:$0xff]
    %v135 = vld [vmem:[#allocation7 + $0x18] sm:$0xff]
    %v136 = vld [vmem:[#allocation7 + $0x20] sm:$0xff]
    %v137 = vld [vmem:[#allocation7 + $0x28] sm:$0xff]
    %v138 = vld [vmem:[#allocation7 + $0x30] sm:$0xff]
    %v139 = vld [vmem:[#allocation7 + $0x38] sm:$0xff]
    %v140 = vld [vmem:[#allocation7 + $0x40] sm:$0xff]
    %v141 = vld [vmem:[#allocation7 + $0x48] sm:$0xff]
    %v142 = vld [vmem:[#allocation7 + $0x50] sm:$0xff]
    %v143 = vld [vmem:[#allocation7 + $0x58] sm:$0xff]
    %v144 = vld [vmem:[#allocation7 + $0x60] sm:$0xff]
    %v145 = vld [vmem:[#allocation7 + $0x68] sm:$0xff]
    %v146 = vld [vmem:[#allocation7 + $0x70] sm:$0xff]
    %v147 = vld [vmem:[#allocation7 + $0x78] sm:$0xff]
    %v148 = vld [vmem:[%s4] sm:$0x1]
    %v150 = vperm.slane %v148, 0
    %152 = vmatpush.msra.mxu0 %v147
    %153 = vmatpush.msra.mxu0 %v146
    %154 = vmatpush.msra.mxu0 %v145
    %155 = vmatpush.msra.mxu0 %v144
    %156 = vmatpush.msra.mxu0 %v143
    %157 = vmatpush.msra.mxu0 %v142
    %158 = vmatpush.msra.mxu0 %v141
    %159 = vmatpush.msra.mxu0 %v140
    %160 = vmatpush.msra.mxu0 %v139
    %161 = vmatpush.msra.mxu0 %v138
    %162 = vmatpush.msra.mxu0 %v137
    %163 = vmatpush.msra.mxu0 %v136
    %164 = vmatpush.msra.mxu0 %v135
    %165 = vmatpush.msra.mxu0 %v134
    %166 = vmatpush.msra.mxu0 %v133
    %167 = vmatpush.msra.mxu0 %v132
    %168 = vmatmul.f32.gmra.mxu0 %v131
    %v169 = vpop.f32.mrf.mxu0
    %v170 = vadd.f32 %v150, %v169
    %171 = vdwg.mxu0
    %v172 = vmax.f32 %v170, 0.0
    %v173 = vld [vmem:[#allocation8] sm:$0xff]
    %v174 = vld [vmem:[#allocation8 + $0x8] sm:$0xff]
    %v175 = vld [vmem:[#allocation8 + $0x10] sm:$0xff]
    %v176 = vld [vmem:[#allocation8 + $0x18] sm:$0xff]
    %v177 = vld [vmem:[#allocation8 + $0x20] sm:$0xff]
    %v178 = vld [vmem:[#allocation8 + $0x28] sm:$0xff]
    %v179 = vld [vmem:[#allocation8 + $0x30] sm:$0xff]
    %v180 = vld [vmem:[#allocation8 + $0x38] sm:$0xff]
    %v181 = vld [vmem:[#allocation8 + $0x40] sm:$0xff]
    %v182 = vld [vmem:[#allocation8 + $0x48] sm:$0xff]
    %v183 = vld [vmem:[#allocation8 + $0x50] sm:$0xff]
    %v184 = vld [vmem:[#allocation8 + $0x58] sm:$0xff]
    %v185 = vld [vmem:[#allocation8 + $0x60] sm:$0xff]
    %v186 = vld [vmem:[#allocation8 + $0x68] sm:$0xff]
    %v187 = vld [vmem:[#allocation8 + $0x70] sm:$0xff]
    %v188 = vld [vmem:[#allocation8 + $0x78] sm:$0xff]
    %v189 = vld [vmem:[%s6] sm:$0x1]
    %v191 = vperm.slane %v189, 0
    %193 = vmatpush.msra.mxu0 %v188
    %194 = vmatpush.msra.mxu0 %v187
    %195 = vmatpush.msra.mxu0 %v186
    %196 = vmatpush.msra.mxu0 %v185
    %197 = vmatpush.msra.mxu0 %v184
    %198 = vmatpush.msra.mxu0 %v183
    %199 = vmatpush.msra.mxu0 %v182
    %200 = vmatpush.msra.mxu0 %v181
    %201 = vmatpush.msra.mxu0 %v180
    %202 = vmatpush.msra.mxu0 %v179
    %203 = vmatpush.msra.mxu0 %v178
    %204 = vmatpush.msra.mxu0 %v177
    %205 = vmatpush.msra.mxu0 %v176
    %206 = vmatpush.msra.mxu0 %v175
    %207 = vmatpush.msra.mxu0 %v174
    %208 = vmatpush.msra.mxu0 %v173
    %209 = vmatmul.f32.gmra.mxu0 %v172
    %v210 = vpop.f32.mrf.mxu0
    %v211 = vadd.f32 %v191, %v210
    %212 = vdwg.mxu0
    %213 = vst [vmem:[#allocation10] sm:$0xff] %v211
    // Predicated region
    $region46: #{tpu_custom_call.1} parent=1 // pred_check
      _
    $region47: #{tpu_custom_call.1} parent=1 // pred_check_branch
      %215 = sbr.rel (0) target = $region49
    $region48: #{tpu_custom_call.1} parent=1 // pred_region
      %217 = vsyncadd [#allocation4], 96
      %s218 = sshll.u32 [#allocation10], 4
      %s219 = int_to_ptr.vmem [resolvable:$true] %s218
      %s220 = sshll.u32 %s7, 4
      %s221 = int_to_ptr.hbm [resolvable:$true] %s220
      %226 = dma.vmem_to_hbm [thread:$0]  %s219, 32, %s221, [#allocation4], 32, 32, 2
    $region49: #{tpu_custom_call.1} parent=1 // pred_fallthru
      _
    // Predicated region
    $region50: #{tpu_custom_call.1} parent=1 // pred_check
      _
    $region51: #{tpu_custom_call.1} parent=1 // pred_check_branch
      %228 = sbr.rel (0) target = $region53
    $region52: #{tpu_custom_call.1} parent=1 // pred_region
      %230 = dma.done [#allocation4], 128
    $region53: #{tpu_custom_call.1} parent=1 // pred_fallthru
      _
    %231 = vsyncpa [#allocation3], 1
    %232 = vsyncpa [#allocation6], 1
    %233 = vsyncpa [#allocation9], 1
    %234 = vsyncpa [#allocation4], 1

</llo_original>
